<compile_context>
chip_gen: v7x
topology: tpu7x:2x2x1
jax: 0.10.0
libtpu: 0.0.40
codegen_flags: <defaults>
</compile_context>

<pallas_src>
import functools

import jax
import jax.numpy as jnp
import numpy as np
from jax.experimental import pallas as pl
from jax.experimental.pallas import tpu as pltpu


def _round_up(v, m):
    return ((v + m - 1) // m) * m


def _cdiv(a, b):
    return -(-a // b)


def _log_space_kernel(x_ref, w_ref, b_ref, o_ref, *, n_pad, num_out_cols,
                      max_exponent, scalar_output):
    # Hot path: one MXU matmul (f32 accumulate) + clip/exp/tanh/mul(/add).
    y = jnp.dot(x_ref[...], w_ref[...], preferred_element_type=jnp.float32)
    y = y + b_ref[...]                      # (TILE_B, step*n_pad), blocked cols

    # Lane-aligned block slices (n_pad is a multiple of 128).
    exponent = jnp.clip(y[:, 0:n_pad], -max_exponent, max_exponent)
    out = jnp.exp(exponent) * jnp.tanh(y[:, n_pad:2 * n_pad])
    if scalar_output:
        out = out + y[:, 2 * n_pad:3 * n_pad]
    # True-width store: only num_out_cols lanes of HBM writeback instead of
    # the n_pad-padded slab (this kernel is memory-bound, bytes win).
    o_ref[...] = out[:, :num_out_cols].astype(o_ref.dtype)


def prepare_log_space_params(weight, bias, *, num_outputs, scalar_output,
                             param_dtype=jnp.float32):
    """Repack nn.Linear params once (hoisted out of the per-call path).

    weight: (num_outputs*step, num_inputs)  (PyTorch Linear layout)
    bias:   (num_outputs*step,)
    Returns (w_re, b_re) with shapes (num_inputs, step*N_pad), (1, step*N_pad),
    columns blocked as [exponent | sign | passthrough], each block zero-padded
    to N_pad = round_up(num_outputs, 128) lanes.

    param_dtype=jnp.bfloat16 is the opt-in bf16-at-the-boundary path (halves
    weight HBM/DMA bytes on v6e/v7x); NOTE: bf16 pre-activation into exp()
    loosens accuracy (~1e-2 exponent error -> ~1% relative output error).
    """
    step = 3 if scalar_output else 2
    num_inputs = weight.shape[1]
    n_pad = max(128, _round_up(num_outputs, 128))

    w_t = weight.T                                   # (num_inputs, step*num_outputs)
    b = bias.reshape(1, step * num_outputs)

    w_blocks, b_blocks = [], []
    for k in range(step):
        wb = w_t[:, k::step]                         # (num_inputs, num_outputs)
        bb = b[:, k::step]                           # (1, num_outputs)
        pad = n_pad - num_outputs
        if pad:
            wb = jnp.pad(wb, ((0, 0), (0, pad)))
            bb = jnp.pad(bb, ((0, 0), (0, pad)))
        w_blocks.append(wb)
        b_blocks.append(bb)
    w_re = jnp.concatenate(w_blocks, axis=1).astype(param_dtype)   # (K, step*n_pad)
    b_re = jnp.concatenate(b_blocks, axis=1).astype(jnp.float32)   # (1, step*n_pad), keep f32
    return w_re, b_re


def log_space_converter(x, w_re, b_re, *, num_outputs, scalar_output,
                        max_exponent=10.0):
    """x: (B, num_inputs); w_re/b_re from prepare_log_space_params().
    Returns (B, num_outputs) f32."""
    step = 3 if scalar_output else 2
    max_exponent = abs(float(max_exponent))
    B, num_inputs = x.shape
    n_pad = w_re.shape[1] // step
    assert w_re.shape == (num_inputs, step * n_pad)

    # bf16-at-the-boundary: if params were prepared in a narrower dtype, feed
    # x in that dtype too so the x DMA (and VMEM buffers) shrink with it.
    if w_re.dtype != x.dtype:
        x = x.astype(w_re.dtype)

    num_out_cols = num_outputs
    # TODO(synk): for num_outputs << 128, benchmark this true-width masked-vst
    # output against a lane-dense n_pad-padded output (8x more HBM writeback).

    # ---- Generation-aware VMEM budget & tile-size selection. ----
    try:
        vmem_cap = int(pltpu.get_tpu_info().vmem_capacity_bytes)
    except Exception:
        vmem_cap = 64 << 20                  # conservative (v7x per-TC) fallback
    budget = int(0.45 * vmem_cap)            # ~28 MiB on v7x, ~57 MiB on v5e/v6e

    w_bytes = jnp.dtype(w_re.dtype).itemsize
    x_bytes = jnp.dtype(x.dtype).itemsize
    out_bytes = 4                            # f32 output
    # Weight & bias are single-buffered (pl.Buffered(1)) -> counted once.
    resident = num_inputs * step * n_pad * w_bytes + step * n_pad * 4
    # x and out tiles are double-buffered by the default pipeline.
    per_row = 2 * (num_inputs * x_bytes + num_out_cols * out_bytes)

    if budget - resident < 8 * per_row:
        # TODO(synk): add a K grid axis ("arbitrary", last) with a VMEM f32
        # accumulator instead of one big dot when num_inputs is this large.
        raise ValueError(
            f"Resident weight/bias ({resident} B) leaves no room for an 8-row "
            f"batch tile within the VMEM budget ({budget} B); tile the "
            "reduction (K) dimension instead of silently using tiny tiles.")

    max_tile = ((budget - resident) // per_row // 8) * 8
    cap = int(min(512, max_tile))            # rows per grid step

    b8 = _round_up(B, 8)
    n_blocks = _cdiv(b8, cap)
    if b8 >= 16:
        # >= 2 grid steps so the "parallel" batch axis shards across both v7x
        # TensorCores; costs one extra ~0.35us grid step on single-TC chips.
        n_blocks = max(n_blocks, 2)
    tile_b = _round_up(_cdiv(b8, n_blocks), 8)   # even split -> minimal padding
    b_pad = tile_b * n_blocks
    if b_pad != B:
        x = jnp.pad(x, ((0, b_pad - B), (0, 0)))
    grid = (n_blocks,)

    vmem_needed = resident + tile_b * per_row
    vmem_limit = int(min(vmem_cap - (8 << 20),          # headroom below physical
                         max(32 << 20, 2 * vmem_needed)))
    vmem_limit = max(vmem_limit, vmem_needed + (2 << 20))

    kernel = functools.partial(
        _log_space_kernel,
        n_pad=n_pad,
        num_out_cols=num_out_cols,
        max_exponent=max_exponent,
        scalar_output=scalar_output,
    )

    cost = pl.CostEstimate(
        flops=2 * b_pad * num_inputs * step * n_pad,
        transcendentals=2 * b_pad * n_pad,               # exp + tanh
        bytes_accessed=(b_pad * num_inputs * x_bytes
                        + num_inputs * step * n_pad * w_bytes
                        + step * n_pad * 4
                        + b_pad * num_out_cols * out_bytes),
    )

    out_pad = pl.pallas_call(
        kernel,
        out_shape=jax.ShapeDtypeStruct((b_pad, num_out_cols), jnp.float32),
        grid=grid,
        in_specs=[
            # x: tiled over batch, default double-buffered pipelining.
            pl.BlockSpec((tile_b, num_inputs), lambda i: (i, 0)),
            # weight / bias: constant index -> VMEM-resident, single buffer.
            pl.BlockSpec((num_inputs, step * n_pad), lambda i: (0, 0),
                         pipeline_mode=pl.Buffered(1)),
            pl.BlockSpec((1, step * n_pad), lambda i: (0, 0),
                         pipeline_mode=pl.Buffered(1)),
        ],
        out_specs=pl.BlockSpec((tile_b, num_out_cols), lambda i: (i, 0)),
        compiler_params=pltpu.CompilerParams(
            dimension_semantics=("parallel",),
            vmem_limit_bytes=vmem_limit,
        ),
        cost_estimate=cost,
    )(x, w_re, b_re)

    return out_pad if b_pad == B else out_pad[:B]


def _reference(x, weight, bias, *, scalar_output, max_exponent=10.0):
    step = 3 if scalar_output else 2
    y = x @ weight.T + bias
    exponent = jnp.clip(y[:, 0::step], -abs(max_exponent), abs(max_exponent))
    out = jnp.exp(exponent) * jnp.tanh(y[:, 1::step])
    if scalar_output:
        out = out + y[:, 2::step]
    return out


if __name__ == "__main__":
    num_inputs, num_outputs = 32, 16
    key = jax.random.PRNGKey(0)

    for scalar_output in (False, True):
        for B in (8, 20):   # 20 exercises batch padding + multi-block grid
            step = 3 if scalar_output else 2
            k_x, k_w, k_b, key = jax.random.split(key, 4)
            # Deterministic init mimicking nn.Linear default (uniform +-1/sqrt(fan_in)).
            bound = 1.0 / np.sqrt(num_inputs)
            weight = jax.random.uniform(
                k_w, (num_outputs * step, num_inputs), jnp.float32, -bound, bound)
            bias = jax.random.uniform(
                k_b, (num_outputs * step,), jnp.float32, -bound, bound)
            x = jax.random.normal(k_x, (B, num_inputs), jnp.float32)

            # Hoisted once per "model init", not per forward call.
            w_re, b_re = prepare_log_space_params(
                weight, bias, num_outputs=num_outputs, scalar_output=scalar_output)

            out = log_space_converter(
                x, w_re, b_re,
                num_outputs=num_outputs, scalar_output=scalar_output)
            out = jax.block_until_ready(out)

            ref = _reference(x, weight, bias, scalar_output=scalar_output)
            np.testing.assert_allclose(np.asarray(out), np.asarray(ref),
                                       rtol=1e-5, atol=1e-5)

    print("KERNEL_OK")
</pallas_src>

<mosaic_0001>
module attributes {stable_mosaic.version = 11 : i64} {
  func.func @_log_space_kernel(%arg0: i32, %arg1: memref<8x32xf32, #tpu.memory_space<vmem>>, %arg2: memref<32x256xf32, #tpu.memory_space<vmem>>, %arg3: memref<1x256xf32, #tpu.memory_space<vmem>>, %arg4: memref<8x16xf32, #tpu.memory_space<vmem>>) attributes {dimension_semantics = [#tpu.dimension_semantics<parallel>], iteration_bounds = array<i64: 1>, scalar_prefetch = 0 : i64, scratch_operands = 0 : i64, tpu.core_type = #tpu.core_type<tc>, window_params = [{transform_indices = @transform_0, window_bounds = array<i64: 8, 32>}, {pipeline_mode = #tpu.pipeline_mode<synchronous>, transform_indices = @transform_1, window_bounds = array<i64: 32, 256>}, {pipeline_mode = #tpu.pipeline_mode<synchronous>, transform_indices = @transform_2, window_bounds = array<i64: 1, 256>}, {transform_indices = @transform_3, window_bounds = array<i64: 8, 16>}]} {
    %c0 = arith.constant 0 : index
    %c0_0 = arith.constant 0 : index
    %0 = vector.load %arg1[%c0, %c0_0] : memref<8x32xf32, #tpu.memory_space<vmem>>, vector<8x32xf32>
    %c0_1 = arith.constant 0 : index
    %c0_2 = arith.constant 0 : index
    %1 = vector.load %arg2[%c0_1, %c0_2] : memref<32x256xf32, #tpu.memory_space<vmem>>, vector<32x256xf32>
    %cst = arith.constant dense<0.000000e+00> : vector<8x256xf32>
    %2 = tpu.matmul %0, %1, %cst {dimension_numbers = #tpu.dot_dimension_numbers<[1], [0], [0], [1], [0, 0, 1, 1], [], []>} : vector<8x32xf32>, vector<32x256xf32>, vector<8x256xf32> -> vector<8x256xf32>
    %c0_3 = arith.constant 0 : index
    %c0_4 = arith.constant 0 : index
    %3 = vector.load %arg3[%c0_3, %c0_4] : memref<1x256xf32, #tpu.memory_space<vmem>>, vector<1x256xf32>
    %4 = vector.broadcast %3 : vector<1x256xf32> to vector<8x256xf32>
    %5 = arith.addf %2, %4 : vector<8x256xf32>
    %6 = vector.extract_strided_slice %5 {offsets = [0, 0], sizes = [8, 128], strides = [1, 1]} : vector<8x256xf32> to vector<8x128xf32>
    %cst_5 = arith.constant -1.000000e+01 : f32
    %cst_6 = arith.constant 1.000000e+01 : f32
    %7 = vector.broadcast %cst_5 : f32 to vector<8x128xf32>
    %8 = arith.maximumf %7, %6 : vector<8x128xf32>
    %9 = vector.broadcast %cst_6 : f32 to vector<8x128xf32>
    %10 = arith.minimumf %9, %8 : vector<8x128xf32>
    %11 = math.exp %10 : vector<8x128xf32>
    %12 = vector.extract_strided_slice %5 {offsets = [0, 128], sizes = [8, 128], strides = [1, 1]} : vector<8x256xf32> to vector<8x128xf32>
    %13 = math.tanh %12 : vector<8x128xf32>
    %14 = arith.mulf %11, %13 : vector<8x128xf32>
    %15 = vector.extract_strided_slice %14 {offsets = [0, 0], sizes = [8, 16], strides = [1, 1]} : vector<8x128xf32> to vector<8x16xf32>
    %c0_7 = arith.constant 0 : index
    %c0_8 = arith.constant 0 : index
    %16 = vector.load %arg4[%c0_7, %c0_8] : memref<8x16xf32, #tpu.memory_space<vmem>>, vector<8x16xf32>
    tpu.vector_store %arg4[%c0_7, %c0_8], %15 {strides = array<i32>} : memref<8x16xf32, #tpu.memory_space<vmem>>, vector<8x16xf32>,
    return
  }
  func.func @transform_0(%arg0: i32) -> (i32, i32) {
    %c0_i32 = arith.constant 0 : i32
    %c0_i32_0 = arith.constant 0 : i32
    return %arg0, %c0_i32 : i32, i32
  }
  func.func @transform_1(%arg0: i32) -> (i32, i32) {
    %c0_i32 = arith.constant 0 : i32
    %c0_i32_0 = arith.constant 0 : i32
    %c0_i32_1 = arith.constant 0 : i32
    return %c0_i32, %c0_i32_0 : i32, i32
  }
  func.func @transform_2(%arg0: i32) -> (i32, i32) {
    %c0_i32 = arith.constant 0 : i32
    %c0_i32_0 = arith.constant 0 : i32
    %c0_i32_1 = arith.constant 0 : i32
    return %c0_i32, %c0_i32_0 : i32, i32
  }
  func.func @transform_3(%arg0: i32) -> (i32, i32) {
    %c0_i32 = arith.constant 0 : i32
    %c0_i32_0 = arith.constant 0 : i32
    return %arg0, %c0_i32 : i32, i32
  }
}

</mosaic_0001>

<llo_original>
// kernel: tpu_custom_call.1
$region0: #{tpu_custom_call.1}
  #allocation0 [shape = 'u32[]', space=smem, size = 0x4, offset = 0x4, fixed_abs, tag = 'smem constant byte address 0x4 - core index']
  #allocation1 [shape = 'u32[144,128]{1,0:T(1,128)}', space=vmem, size = 0x12000, scoped, tag = 'internal scratch']
  %s0 = inlined_call_operand.hbm [shape: f32[8,32], index: 0, kind: input, shape index: {}]
  %s1 = inlined_call_operand.hbm [shape: f32[32,256], index: 1, kind: input, shape index: {}]
  %s2 = inlined_call_operand.vmem [shape: f32[1,256], index: 2, kind: input, shape index: {}]
  %s3 = inlined_call_operand.hbm [shape: f32[8,16], index: 3, kind: output, shape index: {}]
  %s4 = sld [smem:[#allocation0]]
  $region30: #{tpu_custom_call.1} parent=0
    _
  %s6 = ssub.s32 1, %s4
  %s7 = scalar_select 0, %s6, %s4
  $region1: #{tpu_custom_call.1} parent=0
    #allocation2 [shape = 'u8[4096]{0}', space=vmem, size = 0x1000, scoped, tag = 'input window, operand 0, single buffered']
    #allocation3 [shape = 's32[1]{0}', space=sflag, size = 0x4, scoped, tag = 'scoped memory for tpu_custom_call.1']
    #allocation4 [shape = 's32[1]{0}', space=sflag, size = 0x4, scoped, tag = 'scoped memory for tpu_custom_call.1']
    #allocation5 [shape = 'u8[32768]{0}', space=vmem, size = 0x8000, scoped, tag = 'input window, operand 1, single buffered']
    #allocation6 [shape = 's32[1]{0}', space=sflag, size = 0x4, scoped, tag = 'scoped memory for tpu_custom_call.1']
    #allocation7 [shape = 'u8[4096]{0}', space=vmem, size = 0x1000, scoped, tag = 'output window, operand 0, single buffered']
    %8 = vsyncpa [#allocation3], 0
    %9 = vsyncpa [#allocation6], 0
    %10 = vsyncpa [#allocation4], 0
    // Predicated region
    $region2: #{tpu_custom_call.1} parent=1 // pred_check
      _
    $region3: #{tpu_custom_call.1} parent=1 // pred_check_branch
      %12 = sbr.rel (0) target = $region5
    $region4: #{tpu_custom_call.1} parent=1 // pred_region
      %s14 = ssub.s32 128, 128
      %15 = vsyncadd [#allocation3], %s14
      %s17 = sshll.u32 [#allocation2], 4
      %s18 = int_to_ptr.vmem [resolvable:$true] %s17
      %20 = dma.hbm_to_vmem [thread:$0]  %s0, 128, %s18, [#allocation3]
    $region5: #{tpu_custom_call.1} parent=1 // pred_fallthru
      _
    // Predicated region
    $region6: #{tpu_custom_call.1} parent=1 // pred_check
      _
    $region7: #{tpu_custom_call.1} parent=1 // pred_check_branch
      %22 = sbr.rel (0) target = $region9
    $region8: #{tpu_custom_call.1} parent=1 // pred_region
      %s24 = ssub.s32 1024, 1024
      %25 = vsyncadd [#allocation6], %s24
      %s26 = sshll.u32 [#allocation5], 4
      %s27 = int_to_ptr.vmem [resolvable:$true] %s26
      %32 = dma.hbm_to_vmem [thread:$0]  %s1, 1024, %s27, [#allocation6], 256, 256, 16
    $region9: #{tpu_custom_call.1} parent=1 // pred_fallthru
      _
    // Predicated region
    $region10: #{tpu_custom_call.1} parent=1 // pred_check
      _
    $region11: #{tpu_custom_call.1} parent=1 // pred_check_branch
      %34 = sbr.rel (0) target = $region13
    $region12: #{tpu_custom_call.1} parent=1 // pred_region
      _
    $region13: #{tpu_custom_call.1} parent=1 // pred_fallthru
      _
    // Predicated region
    $region14: #{tpu_custom_call.1} parent=1 // pred_check
      _
    $region15: #{tpu_custom_call.1} parent=1 // pred_check_branch
      %36 = sbr.rel (0) target = $region17
    $region16: #{tpu_custom_call.1} parent=1 // pred_region
      %37 = dma.done [#allocation3], 128
    $region17: #{tpu_custom_call.1} parent=1 // pred_fallthru
      _
    // Predicated region
    $region18: #{tpu_custom_call.1} parent=1 // pred_check
      _
    $region19: #{tpu_custom_call.1} parent=1 // pred_check_branch
      %39 = sbr.rel (0) target = $region21
    $region20: #{tpu_custom_call.1} parent=1 // pred_region
      %40 = dma.done [#allocation6], 1024
    $region21: #{tpu_custom_call.1} parent=1 // pred_fallthru
      _
    %v41 = vld [vmem:[#allocation2] sm:$0xff]
    %v42 = vld [vmem:[#allocation5] sm:$0xff]
    %v43 = vld [vmem:[#allocation5 + $0x8] sm:$0xff]
    %v44 = vld [vmem:[#allocation5 + $0x10] sm:$0xff]
    %v45 = vld [vmem:[#allocation5 + $0x18] sm:$0xff]
    %v46 = vld [vmem:[#allocation5 + $0x20] sm:$0xff]
    %v47 = vld [vmem:[#allocation5 + $0x28] sm:$0xff]
    %v48 = vld [vmem:[#allocation5 + $0x30] sm:$0xff]
    %v49 = vld [vmem:[#allocation5 + $0x38] sm:$0xff]
    %v50 = vld [vmem:[%s2] sm:$0x3]
    %v52 = vlaneseq
    %v53 = vshrl.u32 %v52, 7
    %v54 = vsub.s32 0, %v53
    %v55 = vrot.slane %v50, %v54
    %v56 = vlaneseq
    %v57 = vshrl.u32 %v56, 7
    %v58 = vsub.s32 1, %v57
    %v59 = vrot.slane %v50, %v58
    %vm62 = vcmask 261120
    %v64 = vsel %vm62, %v41, 0
    %66 = vmatprep.subr.mxu0 %v43
    %67 = vmatpush1.msra.mxu0 %v42
    %68 = vmatprep.subr.mxu0 %v45
    %69 = vmatpush1.msra.mxu0 %v44
    %70 = vmatprep.subr.mxu0 %v47
    %71 = vmatpush1.msra.mxu0 %v46
    %72 = vmatprep.subr.mxu0 %v49
    %73 = vmatpush1.msra.mxu0 %v48
    %74 = vmatprep.subr.mxu0 0.0
    %75 = vmatpush1.msra.mxu0 0.0
    %76 = vmatprep.subr.mxu0 0.0
    %77 = vmatpush1.msra.mxu0 0.0
    %78 = vmatprep.subr.mxu0 0.0
    %79 = vmatpush1.msra.mxu0 0.0
    %80 = vmatprep.subr.mxu0 0.0
    %81 = vmatpush1.msra.mxu0 0.0
    %82 = vmatprep.subr.mxu0 0.0
    %83 = vmatpush1.msra.mxu0 0.0
    %84 = vmatprep.subr.mxu0 0.0
    %85 = vmatpush1.msra.mxu0 0.0
    %86 = vmatprep.subr.mxu0 0.0
    %87 = vmatpush1.msra.mxu0 0.0
    %88 = vmatprep.subr.mxu0 0.0
    %89 = vmatpush1.msra.mxu0 0.0
    %90 = vmatprep.subr.mxu0 0.0
    %91 = vmatpush1.msra.mxu0 0.0
    %92 = vmatprep.subr.mxu0 0.0
    %93 = vmatpush1.msra.mxu0 0.0
    %94 = vmatprep.subr.mxu0 0.0
    %95 = vmatpush1.msra.mxu0 0.0
    %96 = vmatprep.subr.mxu0 0.0
    %97 = vmatpush1.msra.mxu0 0.0
    %98 = vmatprep.subr.mxu0 0.0
    %99 = vmatpush1.msra.mxu0 0.0
    %100 = vmatprep.subr.mxu0 0.0
    %101 = vmatpush1.msra.mxu0 0.0
    %102 = vmatprep.subr.mxu0 0.0
    %103 = vmatpush1.msra.mxu0 0.0
    %104 = vmatprep.subr.mxu0 0.0
    %105 = vmatpush1.msra.mxu0 0.0
    %106 = vmatprep.subr.mxu0 0.0
    %107 = vmatpush1.msra.mxu0 0.0
    %108 = vmatprep.subr.mxu0 0.0
    %109 = vmatpush1.msra.mxu0 0.0
    %110 = vmatprep.subr.mxu0 0.0
    %111 = vmatpush1.msra.mxu0 0.0
    %112 = vmatprep.subr.mxu0 0.0
    %113 = vmatpush1.msra.mxu0 0.0
    %114 = vmatprep.subr.mxu0 0.0
    %115 = vmatpush1.msra.mxu0 0.0
    %116 = vmatprep.subr.mxu0 0.0
    %117 = vmatpush1.msra.mxu0 0.0
    %118 = vmatprep.subr.mxu0 0.0
    %119 = vmatpush1.msra.mxu0 0.0
    %120 = vmatprep.subr.mxu0 0.0
    %121 = vmatpush1.msra.mxu0 0.0
    %122 = vmatprep.subr.mxu0 0.0
    %123 = vmatpush1.msra.mxu0 0.0
    %124 = vmatprep.subr.mxu0 0.0
    %125 = vmatpush1.msra.mxu0 0.0
    %126 = vmatprep.subr.mxu0 0.0
    %127 = vmatpush1.msra.mxu0 0.0
    %128 = vmatprep.subr.mxu0 0.0
    %129 = vmatpush1.msra.mxu0 0.0
    %130 = vmatprep.mubr.f32.mxu0 0.0
    %131 = vmatmul.mubr.f32.gmra.mrb[0].mxu0 %v64
    %v132 = vpop.f32.mrb[0].mxu0
    %v133 = vadd.f32 %v55, %v132
    %v134 = vpop.f32.mrb[0].mxu0
    %v135 = vadd.f32 %v59, %v134
    %136 = vdwg.mxu0
    %v137 = vmax.f32 %v133, -10.0
    %v138 = vmin.f32 %v137, 10.0
    %v139 = vmul.f32 %v138, 1.442695
    %v140 = vpow.pop %v139
    %v141 = vtanh.pop %v135
    %v142 = vmul.f32 %v140, %v141
    %vm143 = vcmask 130048
    %144 = vst.msk [vmem:[#allocation7] sm:$0xff] %vm143, %v142
    // Predicated region
    $region22: #{tpu_custom_call.1} parent=1 // pred_check
      _
    $region23: #{tpu_custom_call.1} parent=1 // pred_check_branch
      %146 = sbr.rel (0) target = $region25
    $region24: #{tpu_custom_call.1} parent=1 // pred_region
      %s148 = ssub.s32 128, 128
      %149 = vsyncadd [#allocation4], %s148
      %s151 = sshll.u32 [#allocation7], 4
      %s152 = int_to_ptr.vmem [resolvable:$true] %s151
      %154 = dma.vmem_to_hbm [thread:$0]  %s152, 128, %s3, [#allocation4]
    $region25: #{tpu_custom_call.1} parent=1 // pred_fallthru
      _
    // Predicated region
    $region26: #{tpu_custom_call.1} parent=1 // pred_check
      _
    $region27: #{tpu_custom_call.1} parent=1 // pred_check_branch
      %156 = sbr.rel (0) target = $region29
    $region28: #{tpu_custom_call.1} parent=1 // pred_region
      %157 = dma.done [#allocation4], 128
    $region29: #{tpu_custom_call.1} parent=1 // pred_fallthru
      _
    %158 = vsyncpa [#allocation3], 1
    %159 = vsyncpa [#allocation6], 1
    %160 = vsyncpa [#allocation4], 1

</llo_original>
